<compile_context>
chip_gen: v7x
topology: tpu7x:2x2x1
jax: 0.10.0
libtpu: 0.0.40
codegen_flags: <defaults>
</compile_context>

<pallas_src>
import functools

import jax
import jax.numpy as jnp
from jax.experimental import pallas as pl
from jax.experimental.pallas import tpu as pltpu


def _normalize_kernel(scale_ref, bias_ref, x_ref, o_ref, *, rb):
    """(x - mean)/std as x*scale + bias.

    scale_ref / bias_ref: resident full-extent (R_pad, 1) f32 blocks (constant
                          index_map -> DMA'd once for the whole grid).
    x_ref / o_ref:        (rb, lb) tiles of the lane-dense (N*C, H*W) view.
    """
    r0 = pl.multiple_of(pl.program_id(0) * rb, rb)
    scale = scale_ref[pl.ds(r0, rb), :]          # (rb, 1) f32
    bias = bias_ref[pl.ds(r0, rb), :]            # (rb, 1) f32
    # f32 compute keeps accuracy; for f32 inputs the astype is a no-op.
    # (Optional v6e/v7x micro-opt: native bf16 FMA — irrelevant while HBM-bound.)
    x = x_ref[...].astype(jnp.float32)
    o_ref[...] = (x * scale + bias).astype(o_ref.dtype)


def _hw_budgets():
    """(target bytes per x-block, scoped VMEM limit) keyed off VMEM capacity.

    Footprint per step is ~4x the block (x in + out, each double-buffered)
    plus the tiny resident scale/bias, so the limits leave ample headroom.
    """
    vmem_cap = 128 << 20
    try:
        vmem_cap = int(pltpu.get_tpu_info().vmem_capacity_bytes)
    except Exception:  # introspection unavailable -> conservative default
        pass
    if vmem_cap <= (64 << 20):
        # v7x-class: 64 MiB/TC, ~3.2 TB/s HBM -> bigger blocks amortize the
        # ~0.35us/step overhead; 6 MiB block -> ~24 MiB buffered < 48 MiB cap.
        return 6 << 20, 48 << 20
    # v5e/v6e-class: 128 MiB VMEM, 0.8-1.4 TB/s HBM.
    return 3 << 20, 64 << 20


def _round_to_divisor(total, blk, unit):
    """Round blk (multiple of `unit`) down to a divisor of `total` if that
    costs at most a 2x shrink; otherwise keep blk (ragged tail accepted)."""
    if total % unit != 0 or blk >= total:
        return blk
    d = blk
    while d > unit and total % d != 0:
        d -= unit
    if total % d == 0 and 2 * d >= blk:
        return d
    return blk


def _choose_tiles(R, L, itemsize, target_bytes):
    """Pick (Rb, Lb) row/lane block sizes for the (R, L) slab."""
    sub = 8 * max(1, 4 // max(1, itemsize))   # sublane pack: f32->8, bf16->16, i8->32
    lane = 128

    # Lane axis: full extent (always legal) unless even one sublane pack of
    # rows overflows the target (large H*W) -> tile in 128-lane multiples.
    if L <= lane or L * sub * itemsize <= target_bytes:
        Lb = L
    else:
        want = max(lane, (target_bytes // (sub * itemsize)) // lane * lane)
        Lb = min(_round_to_divisor(L, want, lane), L)

    # Row axis: as many sublane packs as fit the target at this lane width.
    rows = max(1, target_bytes // max(1, Lb * itemsize))
    if rows >= R:
        Rb = R
    else:
        Rb = max(sub, (rows // sub) * sub)
        Rb = min(_round_to_divisor(R, Rb, sub), R)

    # v7x has 2 TensorCores streaming HBM independently: a 1-step grid leaves
    # half the chip's bandwidth idle, so force >= 2 grid steps when possible.
    if pl.cdiv(R, Rb) * pl.cdiv(L, Lb) < 2:
        if Rb > sub:
            Rb = max(sub, (((Rb + 1) // 2) // sub) * sub)
        elif Lb > lane:
            Lb = max(lane, (((Lb + 1) // 2) // lane) * lane)
    return Rb, Lb


def normalize(x, mean, std):
    """x: (N, C, H, W); mean, std: (C,). Returns (x - mean) / std per channel."""
    N, C, H, W = x.shape
    R = N * C
    L = H * W

    target_bytes, vmem_limit = _hw_budgets()
    Rb, Lb = _choose_tiles(R, L, x.dtype.itemsize, target_bytes)
    gr = pl.cdiv(R, Rb)
    gl = pl.cdiv(L, Lb)
    R_pad = gr * Rb  # pad the per-row constants so the in-kernel slice never OOBs

    # Per-channel constants in f32, expanded to one value per flattened row
    # (row r of the (N*C, H*W) view -> channel r % C).
    inv_std = 1.0 / std.astype(jnp.float32)
    scale = jnp.tile(inv_std, N)                                  # (R,) f32
    bias = jnp.tile(-mean.astype(jnp.float32) * inv_std, N)       # (R,) f32
    if R_pad > R:
        scale = jnp.pad(scale, (0, R_pad - R), constant_values=1.0)
        bias = jnp.pad(bias, (0, R_pad - R))
    scale = scale.reshape(R_pad, 1)
    bias = bias.reshape(R_pad, 1)

    # Lane-dense 2D view: (N*C, H*W). Row-major reshape is free.
    x2 = x.reshape(R, L)

    out2 = pl.pallas_call(
        functools.partial(_normalize_kernel, rb=Rb),
        out_shape=jax.ShapeDtypeStruct((R, L), x.dtype),
        grid=(gr, gl),
        in_specs=[
            pl.BlockSpec((R_pad, 1), lambda i, j: (0, 0)),   # resident scale (f32)
            pl.BlockSpec((R_pad, 1), lambda i, j: (0, 0)),   # resident bias  (f32)
            pl.BlockSpec((Rb, Lb), lambda i, j: (i, j)),     # x slab
        ],
        out_specs=pl.BlockSpec((Rb, Lb), lambda i, j: (i, j)),
        compiler_params=pltpu.CompilerParams(
            dimension_semantics=("parallel", "parallel"),
            vmem_limit_bytes=vmem_limit,
        ),
    )(scale, bias, x2)

    return out2.reshape(N, C, H, W)


if __name__ == "__main__":
    key = jax.random.PRNGKey(0)

    N, C, H, W = 2, 4, 16, 16
    x = jax.random.normal(key, (N, C, H, W), dtype=jnp.float32)

    # Deterministic per-channel normalization constants (CIFAR-style, padded to C=4).
    mean = jnp.array([0.4914, 0.4822, 0.4465, 0.5000], dtype=jnp.float32)
    std = jnp.array([0.2470, 0.2435, 0.2616, 0.2500], dtype=jnp.float32)

    out = jax.block_until_ready(normalize(x, mean, std))

    # Reference check (plain JAX broadcasting, matches PyTorch semantics).
    ref = (x - mean[None, :, None, None]) / std[None, :, None, None]
    assert out.shape == ref.shape and out.dtype == ref.dtype
    # Kernel uses x*(1/std) - mean/std (FMA) instead of a divide: ~1 ulp difference.
    assert jnp.allclose(out, ref, atol=1e-5, rtol=1e-5)

    print("KERNEL_OK")
</pallas_src>

<mosaic_0001>
module attributes {stable_mosaic.version = 11 : i64} {
  func.func @_normalize_kernel(%arg0: i32, %arg1: i32, %arg2: memref<8x1xf32, #tpu.memory_space<vmem>>, %arg3: memref<8x1xf32, #tpu.memory_space<vmem>>, %arg4: memref<8x128xf32, #tpu.memory_space<vmem>>, %arg5: memref<8x128xf32, #tpu.memory_space<vmem>>) attributes {dimension_semantics = [#tpu.dimension_semantics<parallel>, #tpu.dimension_semantics<parallel>], iteration_bounds = array<i64: 1, 2>, scalar_prefetch = 0 : i64, scratch_operands = 0 : i64, tpu.core_type = #tpu.core_type<tc>, window_params = [{pipeline_mode = #tpu.pipeline_mode<synchronous>, transform_indices = @transform_0, window_bounds = array<i64: 8, 1>}, {pipeline_mode = #tpu.pipeline_mode<synchronous>, transform_indices = @transform_1, window_bounds = array<i64: 8, 1>}, {transform_indices = @transform_2, window_bounds = array<i64: 8, 128>}, {transform_indices = @transform_3, window_bounds = array<i64: 8, 128>}]} {
    %c8_i32 = arith.constant 8 : i32
    %0 = arith.muli %arg0, %c8_i32 : i32
    %1 = tpu.assume_multiple %0, 8 : i32
    %2 = arith.index_cast %1 : i32 to index
    %c0 = arith.constant 0 : index
    %3 = vector.load %arg2[%2, %c0] : memref<8x1xf32, #tpu.memory_space<vmem>>, vector<8x1xf32>
    %4 = arith.index_cast %1 : i32 to index
    %c0_0 = arith.constant 0 : index
    %5 = vector.load %arg3[%4, %c0_0] : memref<8x1xf32, #tpu.memory_space<vmem>>, vector<8x1xf32>
    %c0_1 = arith.constant 0 : index
    %c0_2 = arith.constant 0 : index
    %6 = vector.load %arg4[%c0_1, %c0_2] : memref<8x128xf32, #tpu.memory_space<vmem>>, vector<8x128xf32>
    %7 = vector.broadcast %3 : vector<8x1xf32> to vector<8x128xf32>
    %8 = arith.mulf %6, %7 : vector<8x128xf32>
    %9 = vector.broadcast %5 : vector<8x1xf32> to vector<8x128xf32>
    %10 = arith.addf %8, %9 : vector<8x128xf32>
    %c0_3 = arith.constant 0 : index
    %c0_4 = arith.constant 0 : index
    %11 = vector.load %arg5[%c0_3, %c0_4] : memref<8x128xf32, #tpu.memory_space<vmem>>, vector<8x128xf32>
    tpu.vector_store %arg5[%c0_3, %c0_4], %10 {strides = array<i32>} : memref<8x128xf32, #tpu.memory_space<vmem>>, vector<8x128xf32>,
    return
  }
  func.func @transform_0(%arg0: i32, %arg1: i32) -> (i32, i32) {
    %c0_i32 = arith.constant 0 : i32
    %c0_i32_0 = arith.constant 0 : i32
    %c0_i32_1 = arith.constant 0 : i32
    return %c0_i32, %c0_i32_0 : i32, i32
  }
  func.func @transform_1(%arg0: i32, %arg1: i32) -> (i32, i32) {
    %c0_i32 = arith.constant 0 : i32
    %c0_i32_0 = arith.constant 0 : i32
    %c0_i32_1 = arith.constant 0 : i32
    return %c0_i32, %c0_i32_0 : i32, i32
  }
  func.func @transform_2(%arg0: i32, %arg1: i32) -> (i32, i32) {
    %c0_i32 = arith.constant 0 : i32
    return %arg0, %arg1 : i32, i32
  }
  func.func @transform_3(%arg0: i32, %arg1: i32) -> (i32, i32) {
    %c0_i32 = arith.constant 0 : i32
    return %arg0, %arg1 : i32, i32
  }
}

</mosaic_0001>

<llo_original>
// kernel: tpu_custom_call.1
$region0: #{tpu_custom_call.1}
  #allocation0 [shape = 'u32[]', space=smem, size = 0x4, offset = 0x4, fixed_abs, tag = 'smem constant byte address 0x4 - core index']
  #allocation1 [shape = 'u32[144,128]{1,0:T(1,128)}', space=vmem, size = 0x12000, scoped, tag = 'internal scratch']
  %s0 = inlined_call_operand.hbm [shape: f32[8,1], index: 0, kind: input, shape index: {}]
  %s1 = inlined_call_operand.hbm [shape: f32[8,1], index: 1, kind: input, shape index: {}]
  %s2 = inlined_call_operand.hbm [shape: f32[8,256], index: 2, kind: input, shape index: {}]
  %s3 = inlined_call_operand.hbm [shape: f32[8,256], index: 3, kind: output, shape index: {}]
  %s4 = sld [smem:[#allocation0]]
  $region57: #{tpu_custom_call.1} parent=0
    _
  %s6 = ssub.s32 1, %s4
  %s7 = scalar_select 0, %s6, %s4
  $region1: #{tpu_custom_call.1} parent=0
    #allocation2 [shape = 'u8[4096]{0}', space=vmem, size = 0x1000, scoped, tag = 'input window, operand 0, single buffered']
    #allocation3 [shape = 's32[2]{0}', space=sflag, size = 0x8, scoped, tag = 'scoped memory for tpu_custom_call.1']
    #allocation4 [shape = 's32[2]{0}', space=sflag, size = 0x8, scoped, tag = 'scoped memory for tpu_custom_call.1']
    #allocation5 [shape = 'u8[4096]{0}', space=vmem, size = 0x1000, scoped, tag = 'input window, operand 1, single buffered']
    #allocation6 [shape = 's32[1]{0}', space=sflag, size = 0x4, scoped, tag = 'scoped memory for tpu_custom_call.1']
    #allocation7 [shape = 'u8[8192]{0}', space=vmem, size = 0x2000, scoped, tag = 'input window, operand 2']
    #allocation8 [shape = 'u8[8192]{0}', space=vmem, size = 0x2000, scoped, tag = 'output window, operand 0']
    %8 = vsyncpa [#allocation3], 0
    %9 = vsyncpa [#allocation6], 0
    %10 = vsyncpa [#allocation4], 0
    %s11 = scalar_lea.sflag [#allocation4], 1
    %12 = vsyncpa %s11, 0
    loop: start=0, step=1, limit=4
    $region2: #{tpu_custom_call.1} parent=1 // loop_pre_header
      _
    $region3: #{tpu_custom_call.1} parent=1 // loop_header
      %s14 = sphi 0, %s18
      %p15 = scmp.ge.s32.totalorder %s14, 4
      %s21 = sphi 0, %s33
      %s22 = sphi 0, %s29
      %s23 = sphi 0, %s21
      %s24 = sphi 0, %s22
      %s25 = sphi 0, %s23
      %s26 = sphi 0, %s24
      %s34 = sphi 0, %s34
      %s36 = sphi 0, %s34
      %s37 = sphi 0, %s36
      %s51 = sphi 0, %s37
      %s55 = sphi 0, %s55
      %s57 = sphi 0, %s55
      %s58 = sphi 0, %s57
      %s72 = sphi 0, %s58
      %s80 = sphi 0, %s82
      %s83 = sphi 0, %s80
      %s84 = sphi 0, %s83
      %s100 = sphi 0, %s84
      %s108 = sphi 0, %s110
      %s111 = sphi 0, %s108
      %s112 = sphi 0, %s111
      %s128 = sphi 0, %s112
    $region4: #{tpu_custom_call.1} parent=1 // loop_header_branch
      %17 = sbr.rel (%p15) target = $region8
    $region5: #{tpu_custom_call.1} parent=1 // loop_body
      %s19 = ssub.s32 %s14, 1
      %s20 = ssub.s32 %s14, 2
      %s27 = sadd.s32 1, %s22
      %p28 = scmp.ge.s32.totalorder %s27, 2
      %s29 = scalar_select %p28, 0, %s27
      %s30 = sadd.s32 1, %s21
      %s31 = scalar_select %p28, %s30, %s21
      %p32 = scmp.ge.s32.totalorder %s31, 1
      %s33 = scalar_select %p32, 0, %s31
      %s35 = sadd.s32 %s34, 1
      %p38 = scmp.eq.s32.totalorder %s14, 1
      %p39 = scmp.ne.s32.totalorder %s34, %s36
      %p40 = scmp.eq.s32.totalorder %s14, 0
      %p41 = por %p39, %p40
      %p42 = scmp.ne.s32.totalorder %s34, %s36
      %p43 = scmp.eq.s32.totalorder %s19, 1
      %p44 = por %p42, %p43
      %p45 = scmp.ne.s32.totalorder %s36, %s37
      %p46 = scmp.eq.s32.totalorder %s19, 0
      %p47 = por %p45, %p46
      %p48 = scmp.ne.s32.totalorder %s36, %s37
      %p49 = scmp.eq.s32.totalorder %s20, 1
      %p50 = por %p48, %p49
      %p52 = scmp.ne.s32.totalorder %s37, %s51
      %p53 = scmp.eq.s32.totalorder %s20, 0
      %p54 = por %p52, %p53
      %s56 = sadd.s32 %s55, 1
      %p59 = scmp.eq.s32.totalorder %s14, 1
      %p60 = scmp.ne.s32.totalorder %s55, %s57
      %p61 = scmp.eq.s32.totalorder %s14, 0
      %p62 = por %p60, %p61
      %p63 = scmp.ne.s32.totalorder %s55, %s57
      %p64 = scmp.eq.s32.totalorder %s19, 1
      %p65 = por %p63, %p64
      %p66 = scmp.ne.s32.totalorder %s57, %s58
      %p67 = scmp.eq.s32.totalorder %s19, 0
      %p68 = por %p66, %p67
      %p69 = scmp.ne.s32.totalorder %s57, %s58
      %p70 = scmp.eq.s32.totalorder %s20, 1
      %p71 = por %p69, %p70
      %p73 = scmp.ne.s32.totalorder %s58, %s72
      %p74 = scmp.eq.s32.totalorder %s20, 0
      %p75 = por %p73, %p74
      %s76 = ssub.s32 %s21, %s33
      %s77 = ssub.s32 %s22, %s29
      %s78 = sor.u32 %s76, %s77
      %p79 = scmp.eq.s32.totalorder %s78, 0
      %s81 = sadd.s32 %s80, 1
      %s82 = scalar_select %p79, %s80, %s81
      %p85 = pneg %p79
      %p86 = scmp.eq.s32.totalorder %s14, 1
      %p87 = por %p85, %p86
      %p88 = scmp.ne.s32.totalorder %s80, %s83
      %p89 = scmp.eq.s32.totalorder %s14, 0
      %p90 = por %p88, %p89
      %p91 = scmp.ne.s32.totalorder %s80, %s83
      %p92 = scmp.eq.s32.totalorder %s19, 1
      %p93 = por %p91, %p92
      %p94 = scmp.ne.s32.totalorder %s83, %s84
      %p95 = scmp.eq.s32.totalorder %s19, 0
      %p96 = por %p94, %p95
      %p97 = scmp.ne.s32.totalorder %s83, %s84
      %p98 = scmp.eq.s32.totalorder %s20, 1
      %p99 = por %p97, %p98
      %p101 = scmp.ne.s32.totalorder %s84, %s100
      %p102 = scmp.eq.s32.totalorder %s20, 0
      %p103 = por %p101, %p102
      %s104 = ssub.s32 %s21, %s33
      %s105 = ssub.s32 %s22, %s29
      %s106 = sor.u32 %s104, %s105
      %p107 = scmp.eq.s32.totalorder %s106, 0
      %s109 = sadd.s32 %s108, 1
      %s110 = scalar_select %p107, %s108, %s109
      %p113 = pneg %p107
      %p114 = scmp.eq.s32.totalorder %s14, 1
      %p115 = por %p113, %p114
      %p116 = scmp.ne.s32.totalorder %s108, %s111
      %p117 = scmp.eq.s32.totalorder %s14, 0
      %p118 = por %p116, %p117
      %p119 = scmp.ne.s32.totalorder %s108, %s111
      %p120 = scmp.eq.s32.totalorder %s19, 1
      %p121 = por %p119, %p120
      %p122 = scmp.ne.s32.totalorder %s111, %s112
      %p123 = scmp.eq.s32.totalorder %s19, 0
      %p124 = por %p122, %p123
      %p125 = scmp.ne.s32.totalorder %s111, %s112
      %p126 = scmp.eq.s32.totalorder %s20, 1
      %p127 = por %p125, %p126
      %p129 = scmp.ne.s32.totalorder %s112, %s128
      %p130 = scmp.eq.s32.totalorder %s20, 0
      %p131 = por %p129, %p130
      %p132 = scmp.le.s32.totalorder 1, %s14
      %p133 = scmp.lt.s32.totalorder %s14, 3
      %p134 = pnand %p132, %p133
      %p135 = pneg %p134
      // Predicated region
      $region9: #{tpu_custom_call.1} parent=5 // pred_check
        _
      $region10: #{tpu_custom_call.1} parent=5 // pred_check_branch
        %137 = sbr.rel (%p134) target = $region12
      $region11: #{tpu_custom_call.1} parent=5 // pred_region
        %s138 = ssub.s32 %s14, 1
        // Predicated region
        $region13: #{tpu_custom_call.1} parent=11 // pred_check
          %p139 = pneg %p47
        $region14: #{tpu_custom_call.1} parent=11 // pred_check_branch
          %141 = sbr.rel (%p139) target = $region16
        $region15: #{tpu_custom_call.1} parent=11 // pred_region
          %s143 = ssub.s32 128, 128
          %144 = vsyncadd [#allocation3], %s143
          %s146 = sshll.u32 [#allocation2], 4
          %s147 = int_to_ptr.vmem [resolvable:$true] %s146
          %149 = dma.hbm_to_vmem [thread:$0]  %s0, 128, %s147, [#allocation3]
        $region16: #{tpu_custom_call.1} parent=11 // pred_fallthru
          _
        // Predicated region
        $region17: #{tpu_custom_call.1} parent=11 // pred_check
          %p150 = pneg %p68
        $region18: #{tpu_custom_call.1} parent=11 // pred_check_branch
          %152 = sbr.rel (%p150) target = $region20
        $region19: #{tpu_custom_call.1} parent=11 // pred_region
          %s154 = ssub.s32 128, 128
          %155 = vsyncadd [#allocation6], %s154
          %s157 = sshll.u32 [#allocation5], 4
          %s158 = int_to_ptr.vmem [resolvable:$true] %s157
          %160 = dma.hbm_to_vmem [thread:$0]  %s1, 128, %s158, [#allocation6]
        $region20: #{tpu_custom_call.1} parent=11 // pred_fallthru
          _
      $region12: #{tpu_custom_call.1} parent=5 // pred_fallthru
        _
      %p161 = scmp.lt.s32.totalorder %s14, 2
      // Predicated region
      $region21: #{tpu_custom_call.1} parent=5 // pred_check
        %p162 = pneg %p161
      $region22: #{tpu_custom_call.1} parent=5 // pred_check_branch
        %164 = sbr.rel (%p162) target = $region24
      $region23: #{tpu_custom_call.1} parent=5 // pred_region
        // Predicated region
        $region25: #{tpu_custom_call.1} parent=23 // pred_check
          %p165 = pneg %p90
        $region26: #{tpu_custom_call.1} parent=23 // pred_check_branch
          %167 = sbr.rel (%p165) target = $region28
        $region27: #{tpu_custom_call.1} parent=23 // pred_region
          %s168 = sand.u32 %s14, 1
          %s169 = scalar_lea.sflag [#allocation3], %s168
          %s170 = sand.u32 %s80, 1
          %s171 = smul.addr %s170, 8
          %s172 = scalar_lea.vmem [#allocation7], %s171
          %s174 = ssub.s32 128, 128
          %175 = vsyncadd %s169, %s174
          %s176 = smul.addr %s21, 2
          %s177 = sadd.s32 %s22, %s176
          %s178 = smul.addr %s177, 128
          %s179 = scalar_lea.hbm %s2, %s178
          %s181 = sshll.u32 %s172, 4
          %s182 = int_to_ptr.vmem [resolvable:$true] %s181
          %184 = dma.hbm_to_vmem [thread:$0]  %s179, 128, %s182, %s169
        $region28: #{tpu_custom_call.1} parent=23 // pred_fallthru
          _
      $region24: #{tpu_custom_call.1} parent=5 // pred_fallthru
        _
      %p185 = scmp.le.s32.totalorder 1, %s14
      %p186 = scmp.lt.s32.totalorder %s14, 3
      %p187 = pnand %p185, %p186
      %p188 = pneg %p187
      // Predicated region
      $region29: #{tpu_custom_call.1} parent=5 // pred_check
        _
      $region30: #{tpu_custom_call.1} parent=5 // pred_check_branch
        %190 = sbr.rel (%p187) target = $region32
      $region31: #{tpu_custom_call.1} parent=5 // pred_region
        %s191 = ssub.s32 %s14, 1
        // Predicated region
        $region33: #{tpu_custom_call.1} parent=31 // pred_check
          %p192 = pneg %p47
        $region34: #{tpu_custom_call.1} parent=31 // pred_check_branch
          %194 = sbr.rel (%p192) target = $region36
        $region35: #{tpu_custom_call.1} parent=31 // pred_region
          %195 = dma.done [#allocation3], 128
        $region36: #{tpu_custom_call.1} parent=31 // pred_fallthru
          _
        // Predicated region
        $region37: #{tpu_custom_call.1} parent=31 // pred_check
          %p196 = pneg %p68
        $region38: #{tpu_custom_call.1} parent=31 // pred_check_branch
          %198 = sbr.rel (%p196) target = $region40
        $region39: #{tpu_custom_call.1} parent=31 // pred_region
          %199 = dma.done [#allocation6], 128
        $region40: #{tpu_custom_call.1} parent=31 // pred_fallthru
          _
        %s200 = sand.u32 %s19, 1
        %s201 = scalar_lea.sflag [#allocation3], %s200
        %s202 = sand.u32 %s83, 1
        %s203 = smul.addr %s202, 8
        %s204 = scalar_lea.vmem [#allocation7], %s203
        // Predicated region
        $region41: #{tpu_custom_call.1} parent=31 // pred_check
          %p205 = pneg %p96
        $region42: #{tpu_custom_call.1} parent=31 // pred_check_branch
          %207 = sbr.rel (%p205) target = $region44
        $region43: #{tpu_custom_call.1} parent=31 // pred_region
          %208 = dma.done %s201, 128
        $region44: #{tpu_custom_call.1} parent=31 // pred_fallthru
          _
        %p209 = pneg %p47
        %p210 = pneg %p44
        %p211 = pneg %p68
        %p212 = pneg %p65
        %s213 = sand.u32 %s19, 1
        %s214 = scalar_lea.sflag [#allocation3], %s213
        %s215 = sand.u32 %s83, 1
        %s216 = smul.addr %s215, 8
        %s217 = scalar_lea.vmem [#allocation7], %s216
        %p218 = pneg %p96
        %p219 = pneg %p93
        %p220 = pneg %p124
        %p221 = pneg %p121
        %s222 = sand.u32 %s111, 1
        %s223 = scalar_lea.sflag [#allocation4], %s222
        %s224 = sand.u32 %s111, 1
        %s225 = smul.addr %s224, 8
        %s226 = scalar_lea.vmem [#allocation8], %s225
        %s227 = smul.u32 %s23, 8
        %s228 = scalar_lea.vmem [#allocation2], %s227
        %v229 = vld [vmem:[%s228] sm:$0xff]
        %s230 = scalar_lea.vmem [#allocation5], %s227
        %v231 = vld [vmem:[%s230] sm:$0xff]
        %v232 = vld [vmem:[%s204] sm:$0xff]
        %234 = vset.pattern.permute.xlu0 0
        %235 = vperm.xlu0 %234, %v229
        %v236 = vpop.permute.xlu0 %235
        %v238 = vmul.f32 %v232, %v236
        %240 = vset.pattern.permute.xlu0 0
        %241 = vperm.xlu0 %240, %v231
        %v242 = vpop.permute.xlu0 %241
        %v244 = vadd.f32 %v238, %v242
        %245 = vst [vmem:[%s226] sm:$0xff] %v244
        %s246 = sand.u32 %s111, 1
        %s247 = scalar_lea.sflag [#allocation4], %s246
        %s248 = sand.u32 %s111, 1
        %s249 = smul.addr %s248, 8
        %s250 = scalar_lea.vmem [#allocation8], %s249
        // Predicated region
        $region45: #{tpu_custom_call.1} parent=31 // pred_check
          %p251 = pneg %p121
        $region46: #{tpu_custom_call.1} parent=31 // pred_check_branch
          %253 = sbr.rel (%p251) target = $region48
        $region47: #{tpu_custom_call.1} parent=31 // pred_region
          %s255 = ssub.s32 128, 128
          %256 = vsyncadd %s247, %s255
          %s257 = smul.addr %s23, 2
          %s258 = sadd.s32 %s24, %s257
          %s259 = smul.addr %s258, 128
          %s260 = scalar_lea.hbm %s3, %s259
          %s262 = sshll.u32 %s250, 4
          %s263 = int_to_ptr.vmem [resolvable:$true] %s262
          %265 = dma.vmem_to_hbm [thread:$0]  %s263, 128, %s260, %s247
        $region48: #{tpu_custom_call.1} parent=31 // pred_fallthru
          _
      $region32: #{tpu_custom_call.1} parent=5 // pred_fallthru
        _
      %p266 = scmp.le.s32.totalorder 2, %s14
      // Predicated region
      $region49: #{tpu_custom_call.1} parent=5 // pred_check
        %p267 = pneg %p266
      $region50: #{tpu_custom_call.1} parent=5 // pred_check_branch
        %269 = sbr.rel (%p267) target = $region52
      $region51: #{tpu_custom_call.1} parent=5 // pred_region
        %s270 = ssub.s32 %s14, 2
        // Predicated region
        $region53: #{tpu_custom_call.1} parent=51 // pred_check
          %p271 = pneg %p127
        $region54: #{tpu_custom_call.1} parent=51 // pred_check_branch
          %273 = sbr.rel (%p271) target = $region56
        $region55: #{tpu_custom_call.1} parent=51 // pred_region
          %s274 = sand.u32 %s112, 1
          %s275 = scalar_lea.sflag [#allocation4], %s274
          %s276 = sand.u32 %s112, 1
          %s277 = smul.addr %s276, 8
          %s278 = scalar_lea.vmem [#allocation8], %s277
          %279 = dma.done %s275, 128
        $region56: #{tpu_custom_call.1} parent=51 // pred_fallthru
          _
      $region52: #{tpu_custom_call.1} parent=5 // pred_fallthru
        _
    $region6: #{tpu_custom_call.1} parent=1 // loop_footer
      %s18 = sadd.s32 1, %s14
    $region7: #{tpu_custom_call.1} parent=1 // loop_footer_branch
      %13 = sbr.rel target = $region3
    $region8: #{tpu_custom_call.1} parent=1 // loop_exit
      _
    %280 = vsyncpa [#allocation3], 1
    %s281 = scalar_lea.sflag [#allocation3], 1
    %282 = vsyncpa %s281, 1
    %283 = vsyncpa [#allocation6], 1
    %284 = vsyncpa [#allocation4], 1
    %s285 = scalar_lea.sflag [#allocation4], 1
    %286 = vsyncpa %s285, 1

</llo_original>
